<compile_context>
chip_gen: v7x
topology: tpu7x:2x2x1
jax: 0.10.0
libtpu: 0.0.40
codegen_flags: <defaults>
</compile_context>

<pallas_src>
import functools

import jax
import jax.numpy as jnp
import numpy as np
from jax.experimental import pallas as pl
from jax.experimental.pallas import tpu as pltpu

BN_EPS = 1e-5  # PyTorch BatchNorm2d default eps


def _round_up(x, m):
    return (x + m - 1) // m * m


# ----------------------------- Pallas kernels ------------------------------

def _gemm_bias_relu_kernel(x_ref, w_ref, b_ref, o_ref, *, relu):
    """o = act(x @ w + b).  x/w are bf16 tiles, accumulation + epilogue in f32."""
    acc = jnp.dot(x_ref[...], w_ref[...], preferred_element_type=jnp.float32)
    y = acc + b_ref[...]
    if relu:
        y = jnp.maximum(y, 0.0)
    o_ref[...] = y.astype(o_ref.dtype)


def _attn_cls_kernel(x_ref, w1_ref, b1_ref, w2_ref, b2_ref, wcT_ref, bc_ref, o_ref):
    """Per-image SE attention + 1x1 classifier (classify BEFORE upsample).

    x_ref:   (1, H*W, C)  feature map (flattened spatial, channels-last)
    wcT_ref: (K, C)       classifier weight, transposed
    o_ref:   (1, K, H*W)  class logits, channel-major (NCHW-flat spatial)
    """
    x = x_ref[0]                                              # (HW, C)
    # AdaptiveAvgPool2d(1) == mean over spatial
    m = jnp.mean(x, axis=0, keepdims=True)                    # (1, C)
    a1 = jnp.maximum(
        jnp.dot(m, w1_ref[...], preferred_element_type=jnp.float32) + b1_ref[...],
        0.0)                                                  # (1, Cmid)
    a2 = jax.nn.sigmoid(
        jnp.dot(a1, w2_ref[...], preferred_element_type=jnp.float32) + b2_ref[...])
    xa = x * a2                                               # (HW, C)  x * attn
    # z^T[k, hw] = sum_c wc[c, k] * xa[hw, c]   (NT matmul, contracts last dims)
    zT = jax.lax.dot_general(
        wcT_ref[...], xa, (((1,), (1,)), ((), ())),
        preferred_element_type=jnp.float32)                   # (K, HW)
    o_ref[0] = (zT + bc_ref[...]).astype(o_ref.dtype)


def _upsample_kernel(z_ref, rh_ref, rwT_ref, o_ref):
    """Separable bilinear x4 (align_corners=True) for one (image, class) plane.

    z_ref: (1, H, W);  rh_ref: (Ho, H);  rwT_ref: (W, Wo);  o_ref: (1, Ho, Wo)
    """
    z = z_ref[0]                                                        # (H, W)
    t = jnp.dot(rh_ref[...], z, preferred_element_type=jnp.float32)    # (Ho, W)
    o_ref[0] = jnp.dot(t, rwT_ref[...],
                       preferred_element_type=jnp.float32).astype(o_ref.dtype)


# ------------------------------ JAX wrappers --------------------------------

def _conv3x3_bn_relu(x, w_oihw, b, gamma, beta, mean, var, stride):
    """Conv2d(k=3, pad=1, stride) + BN(eval) + ReLU as a tiled im2col GEMM."""
    N, H, W, Cin = x.shape
    Cout = w_oihw.shape[0]
    Ho, Wo = H // stride, W // stride
    xp = jnp.pad(x, ((0, 0), (1, 1), (1, 1), (0, 0)))
    cols = []
    for dy in range(3):                      # patch order: (kh, kw, cin)
        for dx in range(3):
            cols.append(xp[:, dy:dy + stride * (Ho - 1) + 1:stride,
                           dx:dx + stride * (Wo - 1) + 1:stride, :])
    patches = jnp.concatenate(cols, axis=-1).reshape(N * Ho * Wo, 9 * Cin)
    patches = patches.astype(jnp.bfloat16)          # bf16 operands for the MXU

    # Fold conv bias + BN into per-channel scale/shift; scale goes into weights.
    s = gamma / jnp.sqrt(var + BN_EPS)
    shift = beta + s * (b - mean)
    w_gemm = jnp.transpose(w_oihw, (2, 3, 1, 0)).reshape(9 * Cin, Cout)
    w_gemm = (w_gemm * s[None, :]).astype(jnp.bfloat16)

    M = N * Ho * Wo
    kdim = 9 * Cin
    # Tile the M axis.  tm=512 keeps double-buffered blocks ~1-2 MiB here
    # (well under v7x's 64 MiB VMEM); sweep 256/512/1024 per chip if needed.
    M_pad = _round_up(M, 8)
    tm = min(512, M_pad)
    M_pad = _round_up(M_pad, tm)
    if M_pad != M:
        patches = jnp.pad(patches, ((0, M_pad - M), (0, 0)))

    cost = pl.CostEstimate(
        flops=2 * M_pad * kdim * Cout,
        transcendentals=0,
        bytes_accessed=M_pad * kdim * 2 + kdim * Cout * 2 + M_pad * Cout * 4,
    )
    out = pl.pallas_call(
        functools.partial(_gemm_bias_relu_kernel, relu=True),
        grid=(M_pad // tm,),
        in_specs=[
            pl.BlockSpec((tm, kdim), lambda i: (i, 0)),     # patches tile
            pl.BlockSpec((kdim, Cout), lambda i: (0, 0)),   # resident weight
            pl.BlockSpec((1, Cout), lambda i: (0, 0)),      # resident shift
        ],
        out_specs=pl.BlockSpec((tm, Cout), lambda i: (i, 0)),
        out_shape=jax.ShapeDtypeStruct((M_pad, Cout), jnp.float32),
        compiler_params=pltpu.CompilerParams(
            dimension_semantics=("parallel",),
            vmem_limit_bytes=48 * 1024 * 1024,
        ),
        cost_estimate=cost,
    )(patches, w_gemm, shift.reshape(1, Cout).astype(jnp.float32))
    return out[:M].reshape(N, Ho, Wo, Cout)


@functools.lru_cache(maxsize=None)
def _bilinear_matrix_np(n_in, n_out):
    """Row-stochastic (n_out, n_in) matrix for 1-D bilinear, align_corners=True."""
    if n_in == 1:
        return np.ones((n_out, 1), np.float32)
    src = np.arange(n_out, dtype=np.float64) * (n_in - 1) / (n_out - 1)
    i0 = np.clip(np.floor(src).astype(np.int64), 0, n_in - 2)
    frac = (src - i0).astype(np.float32)
    R = np.zeros((n_out, n_in), np.float32)
    rows = np.arange(n_out)
    R[rows, i0] = 1.0 - frac
    R[rows, i0 + 1] += frac
    return R


def _bilinear_matrix_align_corners(n_in, n_out):
    return jnp.asarray(_bilinear_matrix_np(n_in, n_out))


def _attn_classify(x_nhwc, aw1, ab1, aw2, ab2, wc, bc):
    """SE attention + 1x1 classifier -> (N, K, H*W) channel-major logits."""
    N, H, W, C = x_nhwc.shape
    HW = H * W
    Cmid = aw1.shape[1]
    K = wc.shape[1]
    x3 = x_nhwc.reshape(N, HW, C)
    out = pl.pallas_call(
        _attn_cls_kernel,
        grid=(N,),
        in_specs=[
            pl.BlockSpec((1, HW, C), lambda n: (n, 0, 0)),
            pl.BlockSpec((C, Cmid), lambda n: (0, 0)),
            pl.BlockSpec((1, Cmid), lambda n: (0, 0)),
            pl.BlockSpec((Cmid, C), lambda n: (0, 0)),
            pl.BlockSpec((1, C), lambda n: (0, 0)),
            pl.BlockSpec((K, C), lambda n: (0, 0)),
            pl.BlockSpec((K, 1), lambda n: (0, 0)),
        ],
        out_specs=pl.BlockSpec((1, K, HW), lambda n: (n, 0, 0)),
        out_shape=jax.ShapeDtypeStruct((N, K, HW), jnp.float32),
        compiler_params=pltpu.CompilerParams(dimension_semantics=("parallel",)),
    )(x3, aw1, ab1.reshape(1, Cmid), aw2, ab2.reshape(1, C),
      wc.T, bc.reshape(K, 1))
    return out                                               # (N, K, HW)


def _upsample_x4(z_planes, H, W):
    """Separable bilinear x4 (align_corners=True) on (NK, H, W) planes."""
    NK = z_planes.shape[0]
    Ho, Wo = 4 * H, 4 * W
    Rh = _bilinear_matrix_align_corners(H, Ho)               # (Ho, H)
    RwT = _bilinear_matrix_align_corners(W, Wo).T            # (W, Wo)
    return pl.pallas_call(
        _upsample_kernel,
        grid=(NK,),
        in_specs=[
            pl.BlockSpec((1, H, W), lambda i: (i, 0, 0)),
            pl.BlockSpec((Ho, H), lambda i: (0, 0)),
            pl.BlockSpec((W, Wo), lambda i: (0, 0)),
        ],
        out_specs=pl.BlockSpec((1, Ho, Wo), lambda i: (i, 0, 0)),
        out_shape=jax.ShapeDtypeStruct((NK, Ho, Wo), jnp.float32),
        compiler_params=pltpu.CompilerParams(dimension_semantics=("parallel",)),
    )(z_planes, Rh, RwT)


def enhanced_fast_scnn_forward(params, x_nchw):
    p = params
    x = jnp.transpose(x_nchw, (0, 2, 3, 1))          # NCHW -> NHWC
    # lds
    x = _conv3x3_bn_relu(x, p["w1"], p["b1"], p["bn1_g"], p["bn1_b"],
                         p["bn1_m"], p["bn1_v"], stride=2)
    x = _conv3x3_bn_relu(x, p["w2"], p["b2"], p["bn2_g"], p["bn2_b"],
                         p["bn2_m"], p["bn2_v"], stride=2)
    x = _conv3x3_bn_relu(x, p["w3"], p["b3"], p["bn3_g"], p["bn3_b"],
                         p["bn3_m"], p["bn3_v"], stride=1)
    N, H, W, C = x.shape
    K = p["wc"].shape[1]
    # attention + classifier (classify before upsample; no dense kron matrix)
    z = _attn_classify(x, p["aw1"], p["ab1"], p["aw2"], p["ab2"],
                       p["wc"], p["bc"])              # (N, K, H*W)
    z = z.reshape(N * K, H, W)
    up = _upsample_x4(z, H, W)                        # (N*K, 4H, 4W)
    return up.reshape(N, K, 4 * H, 4 * W)             # already NCHW


# --------------------------- deterministic params ---------------------------

def init_params(key, num_classes=2):
    ks = jax.random.split(key, 24)

    def conv_w(k, cout, cin, kh, kw):
        return jax.random.normal(k, (cout, cin, kh, kw), jnp.float32) / jnp.sqrt(cin * kh * kw)

    def vec(k, n, scale=0.1):
        return scale * jax.random.normal(k, (n,), jnp.float32)

    p = {}
    p["w1"] = conv_w(ks[0], 32, 3, 3, 3);   p["b1"] = vec(ks[1], 32)
    p["bn1_g"] = 1.0 + vec(ks[2], 32);      p["bn1_b"] = vec(ks[3], 32)
    p["bn1_m"] = vec(ks[4], 32)
    p["bn1_v"] = 1.0 + 0.1 * jnp.abs(jax.random.normal(ks[5], (32,), jnp.float32))

    p["w2"] = conv_w(ks[6], 64, 32, 3, 3);  p["b2"] = vec(ks[7], 64)
    p["bn2_g"] = 1.0 + vec(ks[8], 64);      p["bn2_b"] = vec(ks[9], 64)
    p["bn2_m"] = vec(ks[10], 64)
    p["bn2_v"] = 1.0 + 0.1 * jnp.abs(jax.random.normal(ks[11], (64,), jnp.float32))

    p["w3"] = conv_w(ks[12], 128, 64, 3, 3); p["b3"] = vec(ks[13], 128)
    p["bn3_g"] = 1.0 + vec(ks[14], 128);     p["bn3_b"] = vec(ks[15], 128)
    p["bn3_m"] = vec(ks[16], 128)
    p["bn3_v"] = 1.0 + 0.1 * jnp.abs(jax.random.normal(ks[17], (128,), jnp.float32))

    # attention 1x1 convs stored as (Cin, Cout) matrices
    p["aw1"] = jax.random.normal(ks[18], (128, 32), jnp.float32) / jnp.sqrt(128.0)
    p["ab1"] = vec(ks[19], 32)
    p["aw2"] = jax.random.normal(ks[20], (32, 128), jnp.float32) / jnp.sqrt(32.0)
    p["ab2"] = vec(ks[21], 128)
    # classifier 1x1 conv
    p["wc"] = jax.random.normal(ks[22], (128, num_classes), jnp.float32) / jnp.sqrt(128.0)
    p["bc"] = vec(ks[23], num_classes)
    return p


# ------------------------------ pure-JAX reference ---------------------------

def reference_forward(params, x_nchw):
    p = params
    x = jnp.transpose(x_nchw, (0, 2, 3, 1))

    def conv_bn_relu(x, w, b, g, be, m, v, stride):
        w_hwio = jnp.transpose(w, (2, 3, 1, 0))
        y = jax.lax.conv_general_dilated(
            x, w_hwio, (stride, stride), ((1, 1), (1, 1)),
            dimension_numbers=("NHWC", "HWIO", "NHWC"))
        y = y + b
        y = (y - m) / jnp.sqrt(v + BN_EPS) * g + be
        return jnp.maximum(y, 0.0)

    x = conv_bn_relu(x, p["w1"], p["b1"], p["bn1_g"], p["bn1_b"], p["bn1_m"], p["bn1_v"], 2)
    x = conv_bn_relu(x, p["w2"], p["b2"], p["bn2_g"], p["bn2_b"], p["bn2_m"], p["bn2_v"], 2)
    x = conv_bn_relu(x, p["w3"], p["b3"], p["bn3_g"], p["bn3_b"], p["bn3_m"], p["bn3_v"], 1)
    m = jnp.mean(x, axis=(1, 2))
    a1 = jnp.maximum(m @ p["aw1"] + p["ab1"], 0.0)
    a2 = jax.nn.sigmoid(a1 @ p["aw2"] + p["ab2"])
    x = x * a2[:, None, None, :]
    N, H, W, C = x.shape
    Rh = _bilinear_matrix_align_corners(H, 4 * H)
    Rw = _bilinear_matrix_align_corners(W, 4 * W)
    up = jnp.einsum("nhwc,Hh,Ww->nHWc", x, Rh, Rw)
    out = up @ p["wc"] + p["bc"]
    return jnp.transpose(out, (0, 3, 1, 2))


if __name__ == "__main__":
    key = jax.random.PRNGKey(0)
    k_param, k_x = jax.random.split(key)
    params = init_params(k_param, num_classes=2)
    x = jax.random.normal(k_x, (2, 3, 16, 16), jnp.float32)   # NCHW, like PyTorch

    out = enhanced_fast_scnn_forward(params, x)
    out = jax.block_until_ready(out)
    assert out.shape == (2, 2, 16, 16), out.shape

    ref = reference_forward(params, x)
    # Tolerance reflects bf16 MXU operands (f32 accumulation) vs an f32 reference.
    np.testing.assert_allclose(np.asarray(out), np.asarray(ref), rtol=2e-2, atol=2e-2)
    print("KERNEL_OK")
</pallas_src>

<mosaic_0001>
module attributes {stable_mosaic.version = 11 : i64} {
  func.func @_gemm_bias_relu_kernel(%arg0: i32, %arg1: memref<128x27xbf16, #tpu.memory_space<vmem>>, %arg2: memref<27x32xbf16, #tpu.memory_space<vmem>>, %arg3: memref<1x32xf32, #tpu.memory_space<vmem>>, %arg4: memref<128x32xf32, #tpu.memory_space<vmem>>) attributes {dimension_semantics = [#tpu.dimension_semantics<parallel>], iteration_bounds = array<i64: 1>, scalar_prefetch = 0 : i64, scratch_operands = 0 : i64, tpu.core_type = #tpu.core_type<tc>, window_params = [{transform_indices = @transform_0, window_bounds = array<i64: 128, 27>}, {pipeline_mode = #tpu.pipeline_mode<synchronous>, transform_indices = @transform_1, window_bounds = array<i64: 27, 32>}, {pipeline_mode = #tpu.pipeline_mode<synchronous>, transform_indices = @transform_2, window_bounds = array<i64: 1, 32>}, {transform_indices = @transform_3, window_bounds = array<i64: 128, 32>}]} {
    %c0 = arith.constant 0 : index
    %c0_0 = arith.constant 0 : index
    %0 = vector.load %arg1[%c0, %c0_0] : memref<128x27xbf16, #tpu.memory_space<vmem>>, vector<128x27xbf16>
    %c0_1 = arith.constant 0 : index
    %c0_2 = arith.constant 0 : index
    %1 = vector.load %arg2[%c0_1, %c0_2] : memref<27x32xbf16, #tpu.memory_space<vmem>>, vector<27x32xbf16>
    %cst = arith.constant dense<0.000000e+00> : vector<128x32xf32>
    %2 = tpu.matmul %0, %1, %cst {dimension_numbers = #tpu.dot_dimension_numbers<[1], [0], [0], [1], [0, 0, 1, 1], [], []>} : vector<128x27xbf16>, vector<27x32xbf16>, vector<128x32xf32> -> vector<128x32xf32>
    %c0_3 = arith.constant 0 : index
    %c0_4 = arith.constant 0 : index
    %3 = vector.load %arg3[%c0_3, %c0_4] : memref<1x32xf32, #tpu.memory_space<vmem>>, vector<1x32xf32>
    %4 = vector.broadcast %3 : vector<1x32xf32> to vector<128x32xf32>
    %5 = arith.addf %2, %4 : vector<128x32xf32>
    %cst_5 = arith.constant 0.000000e+00 : f32
    %6 = vector.broadcast %cst_5 : f32 to vector<128x32xf32>
    %7 = arith.maximumf %5, %6 : vector<128x32xf32>
    %c0_6 = arith.constant 0 : index
    %c0_7 = arith.constant 0 : index
    %8 = vector.load %arg4[%c0_6, %c0_7] : memref<128x32xf32, #tpu.memory_space<vmem>>, vector<128x32xf32>
    tpu.vector_store %arg4[%c0_6, %c0_7], %7 {strides = array<i32>} : memref<128x32xf32, #tpu.memory_space<vmem>>, vector<128x32xf32>,
    return
  }
  func.func @transform_0(%arg0: i32) -> (i32, i32) {
    %c0_i32 = arith.constant 0 : i32
    %c0_i32_0 = arith.constant 0 : i32
    return %arg0, %c0_i32 : i32, i32
  }
  func.func @transform_1(%arg0: i32) -> (i32, i32) {
    %c0_i32 = arith.constant 0 : i32
    %c0_i32_0 = arith.constant 0 : i32
    %c0_i32_1 = arith.constant 0 : i32
    return %c0_i32, %c0_i32_0 : i32, i32
  }
  func.func @transform_2(%arg0: i32) -> (i32, i32) {
    %c0_i32 = arith.constant 0 : i32
    %c0_i32_0 = arith.constant 0 : i32
    %c0_i32_1 = arith.constant 0 : i32
    return %c0_i32, %c0_i32_0 : i32, i32
  }
  func.func @transform_3(%arg0: i32) -> (i32, i32) {
    %c0_i32 = arith.constant 0 : i32
    %c0_i32_0 = arith.constant 0 : i32
    return %arg0, %c0_i32 : i32, i32
  }
}

</mosaic_0001>

<llo_original>
// kernel: tpu_custom_call.1
$region0: #{tpu_custom_call.1}
  #allocation0 [shape = 'u32[]', space=smem, size = 0x4, offset = 0x4, fixed_abs, tag = 'smem constant byte address 0x4 - core index']
  #allocation1 [shape = 'u32[144,128]{1,0:T(1,128)}', space=vmem, size = 0x12000, scoped, tag = 'internal scratch']
  %s0 = inlined_call_operand.vmem [shape: bf16[128,27], index: 0, kind: input, shape index: {}]
  %s1 = inlined_call_operand.vmem [shape: bf16[27,32], index: 1, kind: input, shape index: {}]
  %s2 = inlined_call_operand.vmem [shape: f32[1,32], index: 2, kind: input, shape index: {}]
  %s3 = inlined_call_operand.vmem [shape: f32[128,32], index: 3, kind: output, shape index: {}]
  %s4 = sld [smem:[#allocation0]]
  $region22: #{tpu_custom_call.1} parent=0
    _
  %s6 = ssub.s32 1, %s4
  %s7 = scalar_select 0, %s6, %s4
  // Predicated region
  $region2: #{tpu_custom_call.1} parent=0 // pred_check
    _
  $region3: #{tpu_custom_call.1} parent=0 // pred_check_branch
    %9 = sbr.rel (0) target = $region5
  $region4: #{tpu_custom_call.1} parent=0 // pred_region
    _
  $region5: #{tpu_custom_call.1} parent=0 // pred_fallthru
    _
  // Predicated region
  $region6: #{tpu_custom_call.1} parent=0 // pred_check
    _
  $region7: #{tpu_custom_call.1} parent=0 // pred_check_branch
    %11 = sbr.rel (0) target = $region9
  $region8: #{tpu_custom_call.1} parent=0 // pred_region
    _
  $region9: #{tpu_custom_call.1} parent=0 // pred_fallthru
    _
  // Predicated region
  $region10: #{tpu_custom_call.1} parent=0 // pred_check
    _
  $region11: #{tpu_custom_call.1} parent=0 // pred_check_branch
    %13 = sbr.rel (0) target = $region13
  $region12: #{tpu_custom_call.1} parent=0 // pred_region
    _
  $region13: #{tpu_custom_call.1} parent=0 // pred_fallthru
    _
  %v15 = vld [vmem:[%s0] sm:$0xf]
  %v16 = vld [vmem:[%s0 + $0x4] sm:$0xf]
  %v17 = vld [vmem:[%s0 + $0x8] sm:$0xf]
  %v18 = vld [vmem:[%s0 + $0xc] sm:$0xf]
  %v19 = vld [vmem:[%s0 + $0x10] sm:$0xf]
  %v20 = vld [vmem:[%s0 + $0x14] sm:$0xf]
  %v21 = vld [vmem:[%s0 + $0x18] sm:$0xf]
  %v22 = vld [vmem:[%s0 + $0x1c] sm:$0xf]
  %v23 = vld [vmem:[%s0 + $0x20] sm:$0xf]
  %v24 = vld [vmem:[%s0 + $0x24] sm:$0xf]
  %v25 = vld [vmem:[%s0 + $0x28] sm:$0xf]
  %v26 = vld [vmem:[%s0 + $0x2c] sm:$0xf]
  %v27 = vld [vmem:[%s0 + $0x30] sm:$0xf]
  %v28 = vld [vmem:[%s0 + $0x34] sm:$0xf]
  %v29 = vld [vmem:[%s0 + $0x38] sm:$0xf]
  %v30 = vld [vmem:[%s0 + $0x3c] sm:$0xf]
  %v31 = vld [vmem:[%s1] sm:$0xf]
  %v32 = vld [vmem:[%s1 + $0x4] sm:$0xf]
  %v33 = vld [vmem:[%s1 + $0x8] sm:$0xf]
  %v34 = vld [vmem:[%s1 + $0xc] sm:$0x3]
  %v35 = vld [vmem:[%s2] sm:$0x1]
  %v37 = vlaneseq
  %v38 = vshrl.u32 %v37, 7
  %v39 = vsub.s32 0, %v38
  %v40 = vrot.slane %v35, %v39
  %v58 = vunpack.c.l.b16 %v15
  %v59 = vunpack.c.l.b16 %v16
  %v60 = vunpack.c.l.b16 %v17
  %v61 = vunpack.c.l.b16 %v18
  %v62 = vunpack.c.l.b16 %v19
  %v63 = vunpack.c.l.b16 %v20
  %v64 = vunpack.c.l.b16 %v21
  %v65 = vunpack.c.l.b16 %v22
  %v66 = vunpack.c.l.b16 %v23
  %v67 = vunpack.c.l.b16 %v24
  %v68 = vunpack.c.l.b16 %v25
  %v69 = vunpack.c.l.b16 %v26
  %v70 = vunpack.c.l.b16 %v27
  %v71 = vunpack.c.l.b16 %v28
  %v72 = vunpack.c.l.b16 %v29
  %v73 = vunpack.c.l.b16 %v30
  %v74 = vpack.c.b16 %v59, %v58
  %v75 = vpack.c.b16 %v61, %v60
  %v76 = vpack.c.b16 %v63, %v62
  %v77 = vpack.c.b16 %v65, %v64
  %v78 = vpack.c.b16 %v67, %v66
  %v79 = vpack.c.b16 %v69, %v68
  %v80 = vpack.c.b16 %v71, %v70
  %v81 = vpack.c.b16 %v73, %v72
  %v86 = vunpack.c.l.b16 %v31
  %v87 = vunpack.c.l.b16 %v32
  %v88 = vunpack.c.l.b16 %v33
  %v89 = vunpack.c.l.b16 %v34
  %v90 = vpack.c.b16 %v87, %v86
  %v91 = vpack.c.b16 %v89, %v88
  %vm93 = vcmask 220160
  %v95 = vsel %vm93, %v74, 0
  %v98 = vsel %vm93, %v75, 0
  %v101 = vsel %vm93, %v76, 0
  %v104 = vsel %vm93, %v77, 0
  %v107 = vsel %vm93, %v78, 0
  %v110 = vsel %vm93, %v79, 0
  %v113 = vsel %vm93, %v80, 0
  %v116 = vsel %vm93, %v81, 0
  %vm118 = vcmask 1044480
  %vm119 = vcmask 1045504
  %v120 = vsel %vm118, 4294967295, 65535
  %v121 = vsel %vm119, %v120, 0
  %v123 = vand.u32 %v91, %v121
  %125 = vmatprep.subr.bf16.mxu0 0
  %126 = vmatpush1.bf16.msra.mxu0 %v90
  %127 = vmatprep.subr.bf16.mxu0 0
  %128 = vmatpush1.bf16.msra.mxu0 %v123
  %129 = vmatprep.subr.bf16.mxu0 0
  %130 = vmatpush1.bf16.msra.mxu0 0
  %131 = vmatprep.subr.bf16.mxu0 0
  %132 = vmatpush1.bf16.msra.mxu0 0
  %133 = vmatprep.subr.bf16.mxu0 0
  %134 = vmatpush1.bf16.msra.mxu0 0
  %135 = vmatprep.subr.bf16.mxu0 0
  %136 = vmatpush1.bf16.msra.mxu0 0
  %137 = vmatprep.subr.bf16.mxu0 0
  %138 = vmatpush1.bf16.msra.mxu0 0
  %139 = vmatprep.subr.bf16.mxu0 0
  %140 = vmatpush1.bf16.msra.mxu0 0
  %141 = vmatprep.subr.bf16.mxu0 0
  %142 = vmatpush1.bf16.msra.mxu0 0
  %143 = vmatprep.subr.bf16.mxu0 0
  %144 = vmatpush1.bf16.msra.mxu0 0
  %145 = vmatprep.subr.bf16.mxu0 0
  %146 = vmatpush1.bf16.msra.mxu0 0
  %147 = vmatprep.subr.bf16.mxu0 0
  %148 = vmatpush1.bf16.msra.mxu0 0
  %149 = vmatprep.subr.bf16.mxu0 0
  %150 = vmatpush1.bf16.msra.mxu0 0
  %151 = vmatprep.subr.bf16.mxu0 0
  %152 = vmatpush1.bf16.msra.mxu0 0
  %153 = vmatprep.subr.bf16.mxu0 0
  %154 = vmatpush1.bf16.msra.mxu0 0
  %155 = vmatprep.subr.bf16.mxu0 0
  %156 = vmatpush1.bf16.msra.mxu0 0
  %157 = vmatprep.mubr.bf16.mxu0 0
  %158 = vmatmul.mubr.bf16.gmra.mrb[0].mxu0 %v95
  %v159 = vpop.f32.mrb[0].mxu0
  %v160 = vadd.f32 %v40, %v159
  %v161 = vpop.f32.mrb[0].mxu0
  %v162 = vpop.f32.mrb[0].mxu0
  %v163 = vadd.f32 %v40, %v162
  %v164 = vpop.f32.mrb[0].mxu0
  %165 = vmatprep.mubr.bf16.mxu0 0
  %166 = vmatmul.mubr.bf16.gmra.mrb[0].mxu0 %v98
  %v167 = vpop.f32.mrb[0].mxu0
  %v168 = vadd.f32 %v40, %v167
  %v169 = vpop.f32.mrb[0].mxu0
  %v170 = vpop.f32.mrb[0].mxu0
  %v171 = vadd.f32 %v40, %v170
  %v172 = vpop.f32.mrb[0].mxu0
  %173 = vmatprep.mubr.bf16.mxu0 0
  %174 = vmatmul.mubr.bf16.gmra.mrb[0].mxu0 %v101
  %v175 = vpop.f32.mrb[0].mxu0
  %v176 = vadd.f32 %v40, %v175
  %v177 = vpop.f32.mrb[0].mxu0
  %v178 = vpop.f32.mrb[0].mxu0
  %v179 = vadd.f32 %v40, %v178
  %v180 = vpop.f32.mrb[0].mxu0
  %181 = vmatprep.mubr.bf16.mxu0 0
  %182 = vmatmul.mubr.bf16.gmra.mrb[0].mxu0 %v104
  %v183 = vpop.f32.mrb[0].mxu0
  %v184 = vadd.f32 %v40, %v183
  %v185 = vpop.f32.mrb[0].mxu0
  %v186 = vpop.f32.mrb[0].mxu0
  %v187 = vadd.f32 %v40, %v186
  %v188 = vpop.f32.mrb[0].mxu0
  %189 = vmatprep.mubr.bf16.mxu0 0
  %190 = vmatmul.mubr.bf16.gmra.mrb[0].mxu0 %v107
  %v191 = vpop.f32.mrb[0].mxu0
  %v192 = vadd.f32 %v40, %v191
  %v193 = vpop.f32.mrb[0].mxu0
  %v194 = vpop.f32.mrb[0].mxu0
  %v195 = vadd.f32 %v40, %v194
  %v196 = vpop.f32.mrb[0].mxu0
  %197 = vmatprep.mubr.bf16.mxu0 0
  %198 = vmatmul.mubr.bf16.gmra.mrb[0].mxu0 %v110
  %v199 = vpop.f32.mrb[0].mxu0
  %v200 = vadd.f32 %v40, %v199
  %v201 = vpop.f32.mrb[0].mxu0
  %v202 = vpop.f32.mrb[0].mxu0
  %v203 = vadd.f32 %v40, %v202
  %v204 = vpop.f32.mrb[0].mxu0
  %205 = vmatprep.mubr.bf16.mxu0 0
  %206 = vmatmul.mubr.bf16.gmra.mrb[0].mxu0 %v113
  %v207 = vpop.f32.mrb[0].mxu0
  %v208 = vadd.f32 %v40, %v207
  %v209 = vpop.f32.mrb[0].mxu0
  %v210 = vpop.f32.mrb[0].mxu0
  %v211 = vadd.f32 %v40, %v210
  %v212 = vpop.f32.mrb[0].mxu0
  %213 = vmatprep.mubr.bf16.mxu0 0
  %214 = vmatmul.mubr.bf16.gmra.mrb[0].mxu0 %v116
  %v215 = vpop.f32.mrb[0].mxu0
  %v216 = vadd.f32 %v40, %v215
  %v217 = vpop.f32.mrb[0].mxu0
  %v218 = vpop.f32.mrb[0].mxu0
  %v219 = vadd.f32 %v40, %v218
  %v220 = vpop.f32.mrb[0].mxu0
  %221 = vdwg.mxu0
  %v222 = vmax.f32 %v160, 0.0
  %v223 = vmax.f32 %v163, 0.0
  %v224 = vmax.f32 %v168, 0.0
  %v225 = vmax.f32 %v171, 0.0
  %v226 = vmax.f32 %v176, 0.0
  %v227 = vmax.f32 %v179, 0.0
  %v228 = vmax.f32 %v184, 0.0
  %v229 = vmax.f32 %v187, 0.0
  %v230 = vmax.f32 %v192, 0.0
  %v231 = vmax.f32 %v195, 0.0
  %v232 = vmax.f32 %v200, 0.0
  %v233 = vmax.f32 %v203, 0.0
  %v234 = vmax.f32 %v208, 0.0
  %v235 = vmax.f32 %v211, 0.0
  %v236 = vmax.f32 %v216, 0.0
  %v237 = vmax.f32 %v219, 0.0
  %vm238 = vcmask 261120
  %239 = vst.msk [vmem:[%s3] sm:$0xff] %vm238, %v222
  %240 = vst.msk [vmem:[%s3 + $0x8] sm:$0xff] %vm238, %v223
  %241 = vst.msk [vmem:[%s3 + $0x10] sm:$0xff] %vm238, %v224
  %242 = vst.msk [vmem:[%s3 + $0x18] sm:$0xff] %vm238, %v225
  %243 = vst.msk [vmem:[%s3 + $0x20] sm:$0xff] %vm238, %v226
  %244 = vst.msk [vmem:[%s3 + $0x28] sm:$0xff] %vm238, %v227
  %245 = vst.msk [vmem:[%s3 + $0x30] sm:$0xff] %vm238, %v228
  %246 = vst.msk [vmem:[%s3 + $0x38] sm:$0xff] %vm238, %v229
  %247 = vst.msk [vmem:[%s3 + $0x40] sm:$0xff] %vm238, %v230
  %248 = vst.msk [vmem:[%s3 + $0x48] sm:$0xff] %vm238, %v231
  %249 = vst.msk [vmem:[%s3 + $0x50] sm:$0xff] %vm238, %v232
  %250 = vst.msk [vmem:[%s3 + $0x58] sm:$0xff] %vm238, %v233
  %251 = vst.msk [vmem:[%s3 + $0x60] sm:$0xff] %vm238, %v234
  %252 = vst.msk [vmem:[%s3 + $0x68] sm:$0xff] %vm238, %v235
  %253 = vst.msk [vmem:[%s3 + $0x70] sm:$0xff] %vm238, %v236
  %254 = vst.msk [vmem:[%s3 + $0x78] sm:$0xff] %vm238, %v237
  // Predicated region
  $region14: #{tpu_custom_call.1} parent=0 // pred_check
    _
  $region15: #{tpu_custom_call.1} parent=0 // pred_check_branch
    %256 = sbr.rel (0) target = $region17
  $region16: #{tpu_custom_call.1} parent=0 // pred_region
    _
  $region17: #{tpu_custom_call.1} parent=0 // pred_fallthru
    _
  // Predicated region
  $region18: #{tpu_custom_call.1} parent=0 // pred_check
    _
  $region19: #{tpu_custom_call.1} parent=0 // pred_check_branch
    %258 = sbr.rel (0) target = $region21
  $region20: #{tpu_custom_call.1} parent=0 // pred_region
    _
  $region21: #{tpu_custom_call.1} parent=0 // pred_fallthru
    _

</llo_original>
